<compile_context>
chip_gen: v5e
topology: v5e:2x2
jax: 0.10.0
libtpu: 0.0.40
codegen_flags: <defaults>
</compile_context>

<pallas_src>
import functools

import jax
import jax.numpy as jnp
from jax.experimental import pallas as pl
from jax.experimental.pallas import tpu as pltpu

LOG_2 = 0.30102999566          # verbatim from the PyTorch module (== log10(2))

TARGET_BLOCK_ELEMS = 1 << 20   # ~4 MiB f32 per input per pipeline buffer
OUT_SUB, OUT_LANE = 8, 128     # per-chunk partial-sum output block (lane dense)


def _round_down(x: int, m: int) -> int:
    return (x // m) * m


def _round_up(x: int, m: int) -> int:
    return -(-x // m) * m


def _num_tensorcores() -> int:
    """Best-effort TensorCores-per-chip (1 on v5e/v6e, 2 on dual-TC chips)."""
    try:
        info = pltpu.get_tpu_info()
        for name in ("num_cores", "num_tensorcores", "tensorcores_per_chip",
                     "cores_per_chip", "core_count"):
            v = getattr(info, name, None)
            if v:
                return max(1, min(2, int(v)))
    except Exception:
        pass
    try:
        v = getattr(jax.devices()[0], "num_cores", None)
        if v:
            return max(1, min(2, int(v)))
    except Exception:
        pass
    return 1


def _physical_vmem_bytes() -> int:
    try:
        return int(pltpu.get_tpu_info().vmem_capacity_bytes)
    except Exception:
        return 64 * 1024 * 1024        # conservative default (v7x per-TC)


def _jsd_partial_sum_kernel(p_ref, q_ref, out_ref, acc_ref, *,
                            valid_rows, tile_rows, tiles_per_chunk, lane):
    """Accumulate sum(log(p * (1 - q))) over one parallel chunk.

    acc_ref : (8, lane) f32 VMEM partial, resident across the inner axis.
    out_ref : (8, 128) f32 block -- chunk partial sum broadcast across the
              block (the wrapper reads element [0, 0] of each block).
    """
    c = pl.program_id(0)
    i = pl.program_id(1)

    @pl.when(i == 0)
    def _init():
        acc_ref[...] = jnp.zeros_like(acc_ref)

    # Ragged-edge mask: rows at/after `valid_rows` contribute nothing.  This
    # also neutralizes fully-out-of-range (clamped, duplicated) tiles that a
    # trailing parallel chunk may be handed.
    row0 = (c * tiles_per_chunk + i) * tile_rows
    local_row = jax.lax.broadcasted_iota(jnp.int32, (tile_rows, lane), 0)
    in_bounds = (row0 + local_row) < valid_rows

    p = p_ref[...].astype(jnp.float32)
    q = q_ref[...].astype(jnp.float32)
    # Fused transcendental: sum(log p) + sum(log(1-q)) == sum(log(p*(1-q)))
    # -> one EUP log per element instead of two.
    term = jnp.where(in_bounds, jnp.log(p * (1.0 - q)), 0.0)

    # VPU tree-add down to a tiny (8, lane) resident partial; the only
    # cross-lane (XLU) reduce happens once per chunk in the epilogue.
    acc_ref[...] += term.reshape(tile_rows // 8, 8, lane).sum(axis=0)

    @pl.when(i == pl.num_programs(1) - 1)
    def _finalize():
        s = jnp.sum(acc_ref[...])            # single cross-lane reduce / chunk
        out_ref[...] = jnp.full(out_ref.shape, s, dtype=out_ref.dtype)


def jsd_loss(p: jax.Array, q: jax.Array) -> jax.Array:
    """Compute JSDLoss.forward(p, q) with a tiled, pipelined Pallas kernel."""
    assert p.shape == q.shape, "p and q must have the same shape"
    total = int(p.size)
    assert total > 0

    pf = p.reshape(-1)
    qf = q.reshape(-1)

    itemsize = min(jnp.dtype(p.dtype).itemsize, jnp.dtype(q.dtype).itemsize)
    min_rows = max(8, 32 // max(int(itemsize), 1))   # f32:8, bf16:16, i8/fp8:32

    # Lane width: largest of {512, 256, 128} that divides the element count,
    # so flatten+reshape is a pure bitcast (zero extra HBM copies).
    lane = next((c for c in (512, 256, 128) if total % c == 0), 0)
    if lane:
        main_len = total
    else:
        # Ragged total (not a multiple of 128): single prefix-slice copy of
        # the 128-aligned body; the (<128-element) tail is finished in JAX.
        main_len = _round_down(total, 128)
        lane = (next((c for c in (512, 256, 128) if main_len % c == 0), 128)
                if main_len else 128)

    rows = main_len // lane if main_len else 0

    tail_sum = jnp.zeros((), jnp.float32)
    if main_len < total:
        pt = pf[main_len:].astype(jnp.float32)
        qt = qf[main_len:].astype(jnp.float32)
        tail_sum = jnp.sum(jnp.log(pt)) + jnp.sum(jnp.log(1.0 - qt))

    if rows < min_rows:
        # Too small to be worth a kernel launch (< ~4K elements): plain JAX.
        main_sum = jnp.zeros((), jnp.float32)
        if main_len:
            pm = pf[:main_len].astype(jnp.float32)
            qm = qf[:main_len].astype(jnp.float32)
            main_sum = jnp.sum(jnp.log(pm)) + jnp.sum(jnp.log(1.0 - qm))
        return -1.0 * (LOG_2 + (0.5 / total) * (main_sum + tail_sum))

    p2 = (pf if main_len == total else pf[:main_len]).reshape(rows, lane)
    q2 = (qf if main_len == total else qf[:main_len]).reshape(rows, lane)

    # ---------------- tiling --------------------------------------------
    num_parallel = _num_tensorcores()
    num_parallel = max(1, min(num_parallel, pl.cdiv(rows, min_rows)))

    tile_rows = max(min_rows, _round_down(TARGET_BLOCK_ELEMS // lane, min_rows))
    tile_rows = min(tile_rows, _round_down(rows, min_rows))  # block <= array
    if num_parallel > 1:
        per_chunk = max(min_rows, _round_up(pl.cdiv(rows, num_parallel), min_rows))
        tile_rows = min(tile_rows, per_chunk)

    tiles_total = pl.cdiv(rows, tile_rows)
    tiles_per_chunk = pl.cdiv(tiles_total, num_parallel)
    last_block = tiles_total - 1

    def in_index_map(c, i):
        # Clamp so an overhanging (fully masked) tile of the last parallel
        # chunk never requests an out-of-range block from the DMA engine.
        return (jnp.minimum(c * tiles_per_chunk + i, last_block), 0)

    # Generation-aware VMEM budget: plenty for 2 inputs x 2 buffers x ~4 MiB
    # blocks, but never beyond physical VMEM minus headroom (v7x has 64 MiB).
    vmem_limit = max(32 << 20, min(48 << 20, _physical_vmem_bytes() - (16 << 20)))

    cost = pl.CostEstimate(
        flops=8 * rows * lane,                 # cast, sub, mul, cmp, sel, adds
        transcendentals=rows * lane,           # one log per element
        bytes_accessed=(p2.size * p2.dtype.itemsize
                        + q2.size * q2.dtype.itemsize
                        + num_parallel * OUT_SUB * OUT_LANE * 4),
    )

    kernel = functools.partial(
        _jsd_partial_sum_kernel,
        valid_rows=rows, tile_rows=tile_rows,
        tiles_per_chunk=tiles_per_chunk, lane=lane)

    # NOTE: on v7x one could additionally try pipeline_mode=pl.Buffered(3) on
    # the input specs and pltpu.CORE_PARALLEL on the leading axis; plain
    # "parallel" is kept here as the portable, known-good configuration.
    partial_blocks = pl.pallas_call(
        kernel,
        out_shape=jax.ShapeDtypeStruct((num_parallel * OUT_SUB, OUT_LANE),
                                       jnp.float32),
        grid_spec=pltpu.PrefetchScalarGridSpec(
            num_scalar_prefetch=0,
            grid=(num_parallel, tiles_per_chunk),
            in_specs=[
                pl.BlockSpec((tile_rows, lane), in_index_map),
                pl.BlockSpec((tile_rows, lane), in_index_map),
            ],
            out_specs=pl.BlockSpec((OUT_SUB, OUT_LANE), lambda c, i: (c, 0)),
            scratch_shapes=[pltpu.VMEM((OUT_SUB, lane), jnp.float32)],
        ),
        compiler_params=pltpu.CompilerParams(
            dimension_semantics=("parallel", "arbitrary"),
            vmem_limit_bytes=vmem_limit,
        ),
        cost_estimate=cost,
    )(p2, q2)

    # One partial sum per parallel chunk (broadcast across its (8,128) block).
    partials = partial_blocks.reshape(num_parallel, OUT_SUB, OUT_LANE)[:, 0, 0]
    total_sum = jnp.sum(partials) + tail_sum
    # mean(log p) + mean(log(1-q)) == total_sum / total (ORIGINAL element count)
    return -1.0 * (LOG_2 + (0.5 / total) * total_sum)


if __name__ == "__main__":
    key = jax.random.PRNGKey(0)
    kp, kq = jax.random.split(key)
    # PatchGAN-style per-patch discriminator probabilities: (batch, 1, H, W).
    # 6400 elements -> streams through the kernel and exercises the masked
    # (partial) last tile without any padded input copy.
    shape = (4, 1, 40, 40)
    p = jax.random.uniform(kp, shape, dtype=jnp.float32,
                           minval=1e-3, maxval=1.0 - 1e-3)
    q = jax.random.uniform(kq, shape, dtype=jnp.float32,
                           minval=1e-3, maxval=1.0 - 1e-3)

    loss = jsd_loss(p, q)
    jax.block_until_ready(loss)

    # Pure-JAX reference (same math as the PyTorch module, separate logs).
    ref = -1.0 * (LOG_2 + 0.5 * jnp.mean(jnp.log(p))
                  + 0.5 * jnp.mean(jnp.log(1.0 - q)))
    assert jnp.allclose(loss, ref, rtol=1e-4, atol=1e-5), (loss, ref)

    print("KERNEL_OK")
</pallas_src>

<mosaic_0001>
module attributes {stable_mosaic.version = 11 : i64} {
  func.func @_jsd_partial_sum_kernel(%arg0: i32, %arg1: i32, %arg2: memref<24x256xf32, #tpu.memory_space<vmem>>, %arg3: memref<24x256xf32, #tpu.memory_space<vmem>>, %arg4: memref<8x128xf32, #tpu.memory_space<vmem>>, %arg5: memref<8x256xf32, #tpu.memory_space<vmem>>) attributes {dimension_semantics = [#tpu.dimension_semantics<parallel>, #tpu.dimension_semantics<arbitrary>], iteration_bounds = array<i64: 1, 2>, scalar_prefetch = 0 : i64, scratch_operands = 1 : i64, tpu.core_type = #tpu.core_type<tc>, window_params = [{transform_indices = @transform_0, window_bounds = array<i64: 24, 256>}, {transform_indices = @transform_1, window_bounds = array<i64: 24, 256>}, {transform_indices = @transform_2, window_bounds = array<i64: 8, 128>}]} {
    %c0_i32 = arith.constant 0 : i32
    %0 = arith.cmpi eq, %arg1, %c0_i32 : i32
    %1 = arith.extui %0 : i1 to i32
    %c0_i32_0 = arith.constant 0 : i32
    %2 = arith.cmpi ne, %1, %c0_i32_0 : i32
    scf.if %2 {
      %cst_11 = arith.constant 0.000000e+00 : f32
      %27 = vector.broadcast %cst_11 : f32 to vector<8x256xf32>
      %c0_12 = arith.constant 0 : index
      %c0_13 = arith.constant 0 : index
      %28 = vector.load %arg5[%c0_12, %c0_13] : memref<8x256xf32, #tpu.memory_space<vmem>>, vector<8x256xf32>
      tpu.vector_store %arg5[%c0_12, %c0_13], %27 {strides = array<i32>} : memref<8x256xf32, #tpu.memory_space<vmem>>, vector<8x256xf32>,
    } else {
    }
    %c2_i32 = arith.constant 2 : i32
    %3 = arith.muli %arg0, %c2_i32 : i32
    %4 = arith.addi %3, %arg1 : i32
    %c24_i32 = arith.constant 24 : i32
    %5 = arith.muli %4, %c24_i32 : i32
    %6 = tpu.iota {dimensions = array<i32: 0>} : vector<24x256xi32>
    %7 = vector.broadcast %5 : i32 to vector<24x256xi32>
    %8 = arith.addi %7, %6 : vector<24x256xi32>
    %c25_i32 = arith.constant 25 : i32
    %9 = vector.broadcast %c25_i32 : i32 to vector<24x256xi32>
    %10 = arith.cmpi slt, %8, %9 : vector<24x256xi32>
    %c0 = arith.constant 0 : index
    %c0_1 = arith.constant 0 : index
    %11 = vector.load %arg2[%c0, %c0_1] : memref<24x256xf32, #tpu.memory_space<vmem>>, vector<24x256xf32>
    %c0_2 = arith.constant 0 : index
    %c0_3 = arith.constant 0 : index
    %12 = vector.load %arg3[%c0_2, %c0_3] : memref<24x256xf32, #tpu.memory_space<vmem>>, vector<24x256xf32>
    %cst = arith.constant 1.000000e+00 : f32
    %13 = vector.broadcast %cst : f32 to vector<24x256xf32>
    %14 = arith.subf %13, %12 : vector<24x256xf32>
    %15 = arith.mulf %11, %14 : vector<24x256xf32>
    %16 = math.log %15 : vector<24x256xf32>
    %cst_4 = arith.constant 0.000000e+00 : f32
    %17 = vector.broadcast %cst_4 : f32 to vector<24x256xf32>
    %18 = arith.select %10, %16, %17 : vector<24x256xi1>, vector<24x256xf32>
    %c0_5 = arith.constant 0 : index
    %c0_6 = arith.constant 0 : index
    %19 = vector.load %arg5[%c0_5, %c0_6] : memref<8x256xf32, #tpu.memory_space<vmem>>, vector<8x256xf32>
    %20 = vector.shape_cast %18 : vector<24x256xf32> to vector<3x8x256xf32>
    %cst_7 = arith.constant dense<0.000000e+00> : vector<8x256xf32>
    %21 = vector.multi_reduction <add>, %20, %cst_7 [0] : vector<3x8x256xf32> to vector<8x256xf32>
    %22 = arith.addf %19, %21 : vector<8x256xf32>
    %c0_8 = arith.constant 0 : index
    %c0_9 = arith.constant 0 : index
    %23 = vector.load %arg5[%c0_8, %c0_9] : memref<8x256xf32, #tpu.memory_space<vmem>>, vector<8x256xf32>
    tpu.vector_store %arg5[%c0_8, %c0_9], %22 {strides = array<i32>} : memref<8x256xf32, #tpu.memory_space<vmem>>, vector<8x256xf32>,
    %c1_i32 = arith.constant 1 : i32
    %24 = arith.cmpi eq, %arg1, %c1_i32 : i32
    %25 = arith.extui %24 : i1 to i32
    %c0_i32_10 = arith.constant 0 : i32
    %26 = arith.cmpi ne, %25, %c0_i32_10 : i32
    scf.if %26 {
      %c0_11 = arith.constant 0 : index
      %c0_12 = arith.constant 0 : index
      %27 = vector.load %arg5[%c0_11, %c0_12] : memref<8x256xf32, #tpu.memory_space<vmem>>, vector<8x256xf32>
      %28 = vector.shape_cast %27 : vector<8x256xf32> to vector<1x8x256xf32>
      %cst_13 = arith.constant dense<0.000000e+00> : vector<1xf32>
      %29 = vector.multi_reduction <add>, %28, %cst_13 [1, 2] : vector<1x8x256xf32> to vector<1xf32>
      %30 = vector.shape_cast %29 : vector<1xf32> to vector<1x1x1xf32>
      %31 = vector.extract %30[0, 0, 0] : f32 from vector<1x1x1xf32>
      %32 = vector.broadcast %31 : f32 to vector<8x128xf32>
      %c0_14 = arith.constant 0 : index
      %c0_15 = arith.constant 0 : index
      %33 = vector.load %arg4[%c0_14, %c0_15] : memref<8x128xf32, #tpu.memory_space<vmem>>, vector<8x128xf32>
      tpu.vector_store %arg4[%c0_14, %c0_15], %32 {strides = array<i32>} : memref<8x128xf32, #tpu.memory_space<vmem>>, vector<8x128xf32>,
    } else {
    }
    return
  }
  func.func @transform_0(%arg0: i32, %arg1: i32) -> (i32, i32) {
    %c2_i32 = arith.constant 2 : i32
    %0 = arith.muli %arg0, %c2_i32 : i32
    %1 = arith.addi %0, %arg1 : i32
    %c1_i32 = arith.constant 1 : i32
    %2 = arith.minsi %1, %c1_i32 : i32
    %c0_i32 = arith.constant 0 : i32
    %c0_i32_0 = arith.constant 0 : i32
    return %2, %c0_i32 : i32, i32
  }
  func.func @transform_1(%arg0: i32, %arg1: i32) -> (i32, i32) {
    %c2_i32 = arith.constant 2 : i32
    %0 = arith.muli %arg0, %c2_i32 : i32
    %1 = arith.addi %0, %arg1 : i32
    %c1_i32 = arith.constant 1 : i32
    %2 = arith.minsi %1, %c1_i32 : i32
    %c0_i32 = arith.constant 0 : i32
    %c0_i32_0 = arith.constant 0 : i32
    return %2, %c0_i32 : i32, i32
  }
  func.func @transform_2(%arg0: i32, %arg1: i32) -> (i32, i32) {
    %c0_i32 = arith.constant 0 : i32
    %c0_i32_0 = arith.constant 0 : i32
    return %arg0, %c0_i32 : i32, i32
  }
}

</mosaic_0001>

<llo_original>
// kernel: tpu_custom_call.1
$region0: #{tpu_custom_call.1}
  #allocation0 [shape = 'u32[]', space=smem, size = 0x4, offset = 0x4, fixed_abs, tag = 'smem constant byte address 0x4 - core index']
  #allocation1 [shape = 'u32[72,128]{1,0:T(1,128)}', space=vmem, size = 0x9000, scoped, tag = 'internal scratch']
  #allocation2 [shape = 'f32[8,256]{1,0:T(8,128)}', space=vmem, size = 0x2000, scoped, tag = 'scratch operand']
  %s0 = inlined_call_operand.hbm [shape: f32[25,256], index: 0, kind: input, shape index: {}]
  %s1 = inlined_call_operand.hbm [shape: f32[25,256], index: 1, kind: input, shape index: {}]
  %s2 = inlined_call_operand.hbm [shape: f32[8,128], index: 2, kind: output, shape index: {}]
  %s3 = sld [smem:[#allocation0]]
  $region57: #{tpu_custom_call.1} parent=0
    _
  %s5 = ssub.s32 1, %s3
  %s6 = scalar_select 0, %s5, %s3
  $region1: #{tpu_custom_call.1} parent=0
    #allocation3 [shape = 'u8[49152]{0}', space=vmem, size = 0xc000, scoped, tag = 'input window, operand 0']
    #allocation4 [shape = 's32[2]{0}', space=sflag, size = 0x8, scoped, tag = 'scoped memory for tpu_custom_call.1']
    #allocation5 [shape = 's32[2]{0}', space=sflag, size = 0x8, scoped, tag = 'scoped memory for tpu_custom_call.1']
    #allocation6 [shape = 'u8[49152]{0}', space=vmem, size = 0xc000, scoped, tag = 'input window, operand 1']
    #allocation7 [shape = 's32[2]{0}', space=sflag, size = 0x8, scoped, tag = 'scoped memory for tpu_custom_call.1']
    #allocation8 [shape = 'u8[4096]{0}', space=vmem, size = 0x1000, scoped, tag = 'output window, operand 0, single buffered']
    %7 = vsyncpa [#allocation4], 0
    %s8 = scalar_lea.sflag [#allocation4], 1
    %9 = vsyncpa %s8, 0
    %10 = vsyncpa [#allocation7], 0
    %s11 = scalar_lea.sflag [#allocation7], 1
    %12 = vsyncpa %s11, 0
    %13 = vsyncpa [#allocation5], 0
    loop: start=0, step=1, limit=4
    $region2: #{tpu_custom_call.1} parent=1 // loop_pre_header
      _
    $region3: #{tpu_custom_call.1} parent=1 // loop_header
      %s15 = sphi 0, %s19
      %p16 = scmp.ge.s32.totalorder %s15, 4
      %s22 = sphi 0, %s34
      %s23 = sphi 0, %s30
      %s24 = sphi 0, %s22
      %s25 = sphi 0, %s23
      %s26 = sphi 0, %s24
      %s27 = sphi 0, %s25
      %s45 = sphi 0, %s47
      %s48 = sphi 0, %s45
      %s49 = sphi 0, %s48
      %s65 = sphi 0, %s49
      %s79 = sphi 0, %s81
      %s82 = sphi 0, %s79
      %s83 = sphi 0, %s82
      %s99 = sphi 0, %s83
      %s105 = sphi 0, %s107
      %s108 = sphi 0, %s105
      %s109 = sphi 0, %s108
      %s125 = sphi 0, %s109
    $region4: #{tpu_custom_call.1} parent=1 // loop_header_branch
      %18 = sbr.rel (%p16) target = $region8
    $region5: #{tpu_custom_call.1} parent=1 // loop_body
      %s20 = ssub.s32 %s15, 1
      %s21 = ssub.s32 %s15, 2
      %s28 = sadd.s32 1, %s23
      %p29 = scmp.ge.s32.totalorder %s28, 2
      %s30 = scalar_select %p29, 0, %s28
      %s31 = sadd.s32 1, %s22
      %s32 = scalar_select %p29, %s31, %s22
      %p33 = scmp.ge.s32.totalorder %s32, 1
      %s34 = scalar_select %p33, 0, %s32
      %s35 = smul.u32 %s22, 2
      %s36 = sadd.s32 %s35, %s23
      %p37 = scmp.lt.s32.totalorder %s36, 1
      %s38 = scalar_select %p37, %s36, 1
      %s39 = smul.u32 %s34, 2
      %s40 = sadd.s32 %s39, %s30
      %p41 = scmp.lt.s32.totalorder %s40, 1
      %s42 = scalar_select %p41, %s40, 1
      %s43 = ssub.s32 %s38, %s42
      %p44 = scmp.eq.s32.totalorder %s43, 0
      %s46 = sadd.s32 %s45, 1
      %s47 = scalar_select %p44, %s45, %s46
      %p50 = pneg %p44
      %p51 = scmp.eq.s32.totalorder %s15, 1
      %p52 = por %p50, %p51
      %p53 = scmp.ne.s32.totalorder %s45, %s48
      %p54 = scmp.eq.s32.totalorder %s15, 0
      %p55 = por %p53, %p54
      %p56 = scmp.ne.s32.totalorder %s45, %s48
      %p57 = scmp.eq.s32.totalorder %s20, 1
      %p58 = por %p56, %p57
      %p59 = scmp.ne.s32.totalorder %s48, %s49
      %p60 = scmp.eq.s32.totalorder %s20, 0
      %p61 = por %p59, %p60
      %p62 = scmp.ne.s32.totalorder %s48, %s49
      %p63 = scmp.eq.s32.totalorder %s21, 1
      %p64 = por %p62, %p63
      %p66 = scmp.ne.s32.totalorder %s49, %s65
      %p67 = scmp.eq.s32.totalorder %s21, 0
      %p68 = por %p66, %p67
      %s69 = smul.u32 %s22, 2
      %s70 = sadd.s32 %s69, %s23
      %p71 = scmp.lt.s32.totalorder %s70, 1
      %s72 = scalar_select %p71, %s70, 1
      %s73 = smul.u32 %s34, 2
      %s74 = sadd.s32 %s73, %s30
      %p75 = scmp.lt.s32.totalorder %s74, 1
      %s76 = scalar_select %p75, %s74, 1
      %s77 = ssub.s32 %s72, %s76
      %p78 = scmp.eq.s32.totalorder %s77, 0
      %s80 = sadd.s32 %s79, 1
      %s81 = scalar_select %p78, %s79, %s80
      %p84 = pneg %p78
      %p85 = scmp.eq.s32.totalorder %s15, 1
      %p86 = por %p84, %p85
      %p87 = scmp.ne.s32.totalorder %s79, %s82
      %p88 = scmp.eq.s32.totalorder %s15, 0
      %p89 = por %p87, %p88
      %p90 = scmp.ne.s32.totalorder %s79, %s82
      %p91 = scmp.eq.s32.totalorder %s20, 1
      %p92 = por %p90, %p91
      %p93 = scmp.ne.s32.totalorder %s82, %s83
      %p94 = scmp.eq.s32.totalorder %s20, 0
      %p95 = por %p93, %p94
      %p96 = scmp.ne.s32.totalorder %s82, %s83
      %p97 = scmp.eq.s32.totalorder %s21, 1
      %p98 = por %p96, %p97
      %p100 = scmp.ne.s32.totalorder %s83, %s99
      %p101 = scmp.eq.s32.totalorder %s21, 0
      %p102 = por %p100, %p101
      %s103 = ssub.s32 %s22, %s34
      %p104 = scmp.eq.s32.totalorder %s103, 0
      %s106 = sadd.s32 %s105, 1
      %s107 = scalar_select %p104, %s105, %s106
      %p110 = pneg %p104
      %p111 = scmp.eq.s32.totalorder %s15, 1
      %p112 = por %p110, %p111
      %p113 = scmp.ne.s32.totalorder %s105, %s108
      %p114 = scmp.eq.s32.totalorder %s15, 0
      %p115 = por %p113, %p114
      %p116 = scmp.ne.s32.totalorder %s105, %s108
      %p117 = scmp.eq.s32.totalorder %s20, 1
      %p118 = por %p116, %p117
      %p119 = scmp.ne.s32.totalorder %s108, %s109
      %p120 = scmp.eq.s32.totalorder %s20, 0
      %p121 = por %p119, %p120
      %p122 = scmp.ne.s32.totalorder %s108, %s109
      %p123 = scmp.eq.s32.totalorder %s21, 1
      %p124 = por %p122, %p123
      %p126 = scmp.ne.s32.totalorder %s109, %s125
      %p127 = scmp.eq.s32.totalorder %s21, 0
      %p128 = por %p126, %p127
      %p129 = scmp.le.s32.totalorder 1, %s15
      %p130 = scmp.lt.s32.totalorder %s15, 3
      %p131 = pnand %p129, %p130
      %p132 = pneg %p131
      // Predicated region
      $region9: #{tpu_custom_call.1} parent=5 // pred_check
        _
      $region10: #{tpu_custom_call.1} parent=5 // pred_check_branch
        %134 = sbr.rel (%p131) target = $region12
      $region11: #{tpu_custom_call.1} parent=5 // pred_region
        %s135 = ssub.s32 %s15, 1
      $region12: #{tpu_custom_call.1} parent=5 // pred_fallthru
        _
      %p136 = scmp.lt.s32.totalorder %s15, 2
      // Predicated region
      $region13: #{tpu_custom_call.1} parent=5 // pred_check
        %p137 = pneg %p136
      $region14: #{tpu_custom_call.1} parent=5 // pred_check_branch
        %139 = sbr.rel (%p137) target = $region16
      $region15: #{tpu_custom_call.1} parent=5 // pred_region
        // Predicated region
        $region17: #{tpu_custom_call.1} parent=15 // pred_check
          %p140 = pneg %p55
        $region18: #{tpu_custom_call.1} parent=15 // pred_check_branch
          %142 = sbr.rel (%p140) target = $region20
        $region19: #{tpu_custom_call.1} parent=15 // pred_region
          %s143 = sand.u32 %s45, 1
          %s144 = scalar_lea.sflag [#allocation4], %s143
          %s145 = sand.u32 %s45, 1
          %s146 = smul.addr %s145, 48
          %s147 = scalar_lea.vmem [#allocation3], %s146
          %s148 = smul.u32 %s22, 2
          %s149 = sadd.s32 %s148, %s23
          %p150 = scmp.lt.s32.totalorder %s149, 1
          %s151 = scalar_select %p150, %s149, 1
          %s152 = smul.u32 3, %s151
          %s153 = ssub.s32 4, %s152
          %p154 = scmp.lt.s32.totalorder %s153, 3
          %s155 = scalar_select %p154, %s153, 3
          %s156 = smul.u32 8, %s155
          %s157 = smul.u32 %s156, 2
          %s158 = ssub.s32 48, %s157
          %s159 = sshll.u32 %s158, 4
          %160 = vsyncadd %s144, %s159
          %p161 = scmp.ne.s32.totalorder 0, %s157
          %s162 = smul.addr %s152, 2
          %s163 = smul.addr %s162, 8
          %s164 = scalar_lea.hbm %s0, %s163
          %s165 = smul.u32 16, %s155
          %s166 = sshll.u32 %s164, 4
          %s167 = int_to_ptr.hbm [resolvable:$true] %s166
          %s168 = sshll.u32 %s147, 4
          %s169 = int_to_ptr.vmem [resolvable:$true] %s168
          %s170 = sshll.u32 %s165, 4
          %174 = dma.hbm_to_vmem [thread:$0]  (%p161), %s167, %s170, %s169, %s144, 256, 256, 16
        $region20: #{tpu_custom_call.1} parent=15 // pred_fallthru
          _
        // Predicated region
        $region21: #{tpu_custom_call.1} parent=15 // pred_check
          %p175 = pneg %p89
        $region22: #{tpu_custom_call.1} parent=15 // pred_check_branch
          %177 = sbr.rel (%p175) target = $region24
        $region23: #{tpu_custom_call.1} parent=15 // pred_region
          %s178 = sand.u32 %s79, 1
          %s179 = scalar_lea.sflag [#allocation7], %s178
          %s180 = sand.u32 %s79, 1
          %s181 = smul.addr %s180, 48
          %s182 = scalar_lea.vmem [#allocation6], %s181
          %s183 = smul.u32 %s22, 2
          %s184 = sadd.s32 %s183, %s23
          %p185 = scmp.lt.s32.totalorder %s184, 1
          %s186 = scalar_select %p185, %s184, 1
          %s187 = smul.u32 3, %s186
          %s188 = ssub.s32 4, %s187
          %p189 = scmp.lt.s32.totalorder %s188, 3
          %s190 = scalar_select %p189, %s188, 3
          %s191 = smul.u32 8, %s190
          %s192 = smul.u32 %s191, 2
          %s193 = ssub.s32 48, %s192
          %s194 = sshll.u32 %s193, 4
          %195 = vsyncadd %s179, %s194
          %p196 = scmp.ne.s32.totalorder 0, %s192
          %s197 = smul.addr %s187, 2
          %s198 = smul.addr %s197, 8
          %s199 = scalar_lea.hbm %s1, %s198
          %s200 = smul.u32 16, %s190
          %s201 = sshll.u32 %s199, 4
          %s202 = int_to_ptr.hbm [resolvable:$true] %s201
          %s203 = sshll.u32 %s182, 4
          %s204 = int_to_ptr.vmem [resolvable:$true] %s203
          %s205 = sshll.u32 %s200, 4
          %209 = dma.hbm_to_vmem [thread:$0]  (%p196), %s202, %s205, %s204, %s179, 256, 256, 16
        $region24: #{tpu_custom_call.1} parent=15 // pred_fallthru
          _
      $region16: #{tpu_custom_call.1} parent=5 // pred_fallthru
        _
      %p210 = scmp.le.s32.totalorder 1, %s15
      %p211 = scmp.lt.s32.totalorder %s15, 3
      %p212 = pnand %p210, %p211
      %p213 = pneg %p212
      // Predicated region
      $region25: #{tpu_custom_call.1} parent=5 // pred_check
        _
      $region26: #{tpu_custom_call.1} parent=5 // pred_check_branch
        %215 = sbr.rel (%p212) target = $region28
      $region27: #{tpu_custom_call.1} parent=5 // pred_region
        %s216 = ssub.s32 %s15, 1
        %s217 = sand.u32 %s48, 1
        %s218 = scalar_lea.sflag [#allocation4], %s217
        %s219 = sand.u32 %s48, 1
        %s220 = smul.addr %s219, 48
        %s221 = scalar_lea.vmem [#allocation3], %s220
        // Predicated region
        $region29: #{tpu_custom_call.1} parent=27 // pred_check
          %p222 = pneg %p61
        $region30: #{tpu_custom_call.1} parent=27 // pred_check_branch
          %224 = sbr.rel (%p222) target = $region32
        $region31: #{tpu_custom_call.1} parent=27 // pred_region
          %226 = dma.done %s218, 768
        $region32: #{tpu_custom_call.1} parent=27 // pred_fallthru
          _
        %s227 = sand.u32 %s82, 1
        %s228 = scalar_lea.sflag [#allocation7], %s227
        %s229 = sand.u32 %s82, 1
        %s230 = smul.addr %s229, 48
        %s231 = scalar_lea.vmem [#allocation6], %s230
        // Predicated region
        $region33: #{tpu_custom_call.1} parent=27 // pred_check
          %p232 = pneg %p95
        $region34: #{tpu_custom_call.1} parent=27 // pred_check_branch
          %234 = sbr.rel (%p232) target = $region36
        $region35: #{tpu_custom_call.1} parent=27 // pred_region
          %236 = dma.done %s228, 768
        $region36: #{tpu_custom_call.1} parent=27 // pred_fallthru
          _
        %s237 = sand.u32 %s48, 1
        %s238 = scalar_lea.sflag [#allocation4], %s237
        %s239 = sand.u32 %s48, 1
        %s240 = smul.addr %s239, 48
        %s241 = scalar_lea.vmem [#allocation3], %s240
        %p242 = pneg %p61
        %p243 = pneg %p58
        %s244 = sand.u32 %s82, 1
        %s245 = scalar_lea.sflag [#allocation7], %s244
        %s246 = sand.u32 %s82, 1
        %s247 = smul.addr %s246, 48
        %s248 = scalar_lea.vmem [#allocation6], %s247
        %p249 = pneg %p95
        %p250 = pneg %p92
        %p251 = pneg %p121
        %p252 = pneg %p118
        %s253 = smul.u32 %s24, 2
        %s254 = sadd.s32 %s253, %s25
        %p255 = scmp.lt.s32.totalorder %s254, 1
        %s256 = scalar_select %p255, %s254, 1
        %s257 = smul.u32 3, %s256
        %s258 = ssub.s32 4, %s257
        %p259 = scmp.lt.s32.totalorder %s258, 3
        %s260 = scalar_select %p259, %s258, 3
        %s261 = smul.u32 8, %s260
        %s262 = smul.u32 %s261, 2
        %s263 = smul.u32 %s24, 2
        %s264 = sadd.s32 %s263, %s25
        %p265 = scmp.lt.s32.totalorder %s264, 1
        %s266 = scalar_select %p265, %s264, 1
        %s267 = smul.u32 3, %s266
        %s268 = ssub.s32 4, %s267
        %p269 = scmp.lt.s32.totalorder %s268, 3
        %s270 = scalar_select %p269, %s268, 3
        %s271 = smul.u32 8, %s270
        %s272 = smul.u32 %s271, 2
        %p273 = scmp.eq.s32.totalorder %s25, 0
        // Predicated region
        $region37: #{tpu_custom_call.1} parent=27 // pred_check
          %p274 = pneg %p273
        $region38: #{tpu_custom_call.1} parent=27 // pred_check_branch
          %276 = sbr.rel (%p274) target = $region40
        $region39: #{tpu_custom_call.1} parent=27 // pred_region
          %277 = vst [vmem:[#allocation2] sm:$0xff] 0.0
          %278 = vst [vmem:[#allocation2 + $0x8] sm:$0xff] 0.0
        $region40: #{tpu_custom_call.1} parent=27 // pred_fallthru
          _
        %s279 = smul.u32 %s24, 2
        %s280 = sadd.s32 %s279, %s25
        %s281 = smul.u32 %s280, 24
        %v282 = vlaneseq
        %v283 = vshrl.u32 %v282, 7
        %v284 = vadd.s32 %v283, 8
        %v285 = vadd.s32 %v283, 16
        %v286 = vstv %s281
        %v287 = vadd.s32 %v286, %v283
        %v288 = vadd.s32 %v286, %v284
        %v289 = vadd.s32 %v286, %v285
        %vm290 = vcmp.lt.s32.totalorder %v287, 25
        %vm291 = vcmp.lt.s32.totalorder %v288, 25
        %vm292 = vcmp.lt.s32.totalorder %v289, 25
        %v293 = vld [vmem:[%s221] sm:$0xff]
        %v294 = vld [vmem:[%s221 + $0x8] sm:$0xff]
        %v295 = vld [vmem:[%s221 + $0x10] sm:$0xff]
        %v296 = vld [vmem:[%s221 + $0x18] sm:$0xff]
        %v297 = vld [vmem:[%s221 + $0x20] sm:$0xff]
        %v298 = vld [vmem:[%s221 + $0x28] sm:$0xff]
        %v299 = vld [vmem:[%s231] sm:$0xff]
        %v300 = vld [vmem:[%s231 + $0x8] sm:$0xff]
        %v301 = vld [vmem:[%s231 + $0x10] sm:$0xff]
        %v302 = vld [vmem:[%s231 + $0x18] sm:$0xff]
        %v303 = vld [vmem:[%s231 + $0x20] sm:$0xff]
        %v304 = vld [vmem:[%s231 + $0x28] sm:$0xff]
        %v305 = vsub.f32 1.0, %v299
        %v306 = vsub.f32 1.0, %v300
        %v307 = vsub.f32 1.0, %v301
        %v308 = vsub.f32 1.0, %v302
        %v309 = vsub.f32 1.0, %v303
        %v310 = vsub.f32 1.0, %v304
        %v311 = vmul.f32 %v293, %v305
        %v312 = vmul.f32 %v294, %v306
        %v313 = vmul.f32 %v295, %v307
        %v314 = vmul.f32 %v296, %v308
        %v315 = vmul.f32 %v297, %v309
        %v316 = vmul.f32 %v298, %v310
        %v317 = vlog2.pop %v311
        %v318 = vmul.f32 %v317, 0.6931472
        %v319 = vlog2.pop %v312
        %v320 = vmul.f32 %v319, 0.6931472
        %v321 = vlog2.pop %v313
        %v322 = vmul.f32 %v321, 0.6931472
        %v323 = vlog2.pop %v314
        %v324 = vmul.f32 %v323, 0.6931472
        %v325 = vlog2.pop %v315
        %v326 = vmul.f32 %v325, 0.6931472
        %v327 = vlog2.pop %v316
        %v328 = vmul.f32 %v327, 0.6931472
        %v329 = vsel %vm290, %v318, 0.0
        %v330 = vsel %vm290, %v320, 0.0
        %v331 = vsel %vm291, %v322, 0.0
        %v332 = vsel %vm291, %v324, 0.0
        %v333 = vsel %vm292, %v326, 0.0
        %v334 = vsel %vm292, %v328, 0.0
        %v335 = vld [vmem:[#allocation2] sm:$0xff]
        %v336 = vld [vmem:[#allocation2 + $0x8] sm:$0xff]
        %v337 = vadd.f32 %v329, %v331
        %v338 = vadd.f32 %v337, %v333
        %v339 = vadd.f32 %v330, %v332
        %v340 = vadd.f32 %v339, %v334
        %v341 = vadd.f32 %v335, %v338
        %v342 = vadd.f32 %v336, %v340
        %343 = vst [vmem:[#allocation2] sm:$0xff] %v341
        %344 = vst [vmem:[#allocation2 + $0x8] sm:$0xff] %v342
        %p345 = scmp.eq.s32.totalorder %s25, 1
        // Predicated region
        $region41: #{tpu_custom_call.1} parent=27 // pred_check
          %p346 = pneg %p345
        $region42: #{tpu_custom_call.1} parent=27 // pred_check_branch
          %348 = sbr.rel (%p346) target = $region44
        $region43: #{tpu_custom_call.1} parent=27 // pred_region
          %v349 = vld [vmem:[#allocation2] sm:$0xff]
          %v350 = vld [vmem:[#allocation2 + $0x8] sm:$0xff]
          %v351 = vadd.f32 %v349, %v350
          %352 = vadd.xlane.f32.xlu0 %v351
          %v353 = vpop.xlane.xlu0 %352
          %v354 = vrot.slane %v353, 4
          %v355 = vadd.f32 %v353, %v354
          %v356 = vrot.slane %v355, 2
          %v357 = vadd.f32 %v355, %v356
          %v358 = vrot.slane %v357, 1
          %v359 = vadd.f32 %v357, %v358
          %s360 = vtos %v359
          %v361 = vstv %s360
          %362 = vst [vmem:[#allocation8] sm:$0xff] %v361
        $region44: #{tpu_custom_call.1} parent=27 // pred_fallthru
          _
        // Predicated region
        $region45: #{tpu_custom_call.1} parent=27 // pred_check
          %p363 = pneg %p118
        $region46: #{tpu_custom_call.1} parent=27 // pred_check_branch
          %365 = sbr.rel (%p363) target = $region48
        $region47: #{tpu_custom_call.1} parent=27 // pred_region
          %367 = vsyncadd [#allocation5], 0
          %s368 = smul.addr %s24, 8
          %s369 = scalar_lea.hbm %s2, %s368
          %s371 = sshll.u32 [#allocation8], 4
          %s372 = int_to_ptr.vmem [resolvable:$true] %s371
          %s373 = sshll.u32 %s369, 4
          %s374 = int_to_ptr.hbm [resolvable:$true] %s373
          %376 = dma.vmem_to_hbm [thread:$0]  %s372, 128, %s374, [#allocation5]
        $region48: #{tpu_custom_call.1} parent=27 // pred_fallthru
          _
        // Predicated region
        $region49: #{tpu_custom_call.1} parent=27 // pred_check
          %p377 = pneg %p118
        $region50: #{tpu_custom_call.1} parent=27 // pred_check_branch
          %379 = sbr.rel (%p377) target = $region52
        $region51: #{tpu_custom_call.1} parent=27 // pred_region
          %381 = dma.done [#allocation5], 128
        $region52: #{tpu_custom_call.1} parent=27 // pred_fallthru
          _
      $region28: #{tpu_custom_call.1} parent=5 // pred_fallthru
        _
      %p382 = scmp.le.s32.totalorder 2, %s15
      // Predicated region
      $region53: #{tpu_custom_call.1} parent=5 // pred_check
        %p383 = pneg %p382
      $region54: #{tpu_custom_call.1} parent=5 // pred_check_branch
        %385 = sbr.rel (%p383) target = $region56
      $region55: #{tpu_custom_call.1} parent=5 // pred_region
        %s386 = ssub.s32 %s15, 2
      $region56: #{tpu_custom_call.1} parent=5 // pred_fallthru
        _
    $region6: #{tpu_custom_call.1} parent=1 // loop_footer
      %s19 = sadd.s32 1, %s15
    $region7: #{tpu_custom_call.1} parent=1 // loop_footer_branch
      %14 = sbr.rel target = $region3
    $region8: #{tpu_custom_call.1} parent=1 // loop_exit
      _
    %387 = vsyncpa [#allocation4], 1
    %s388 = scalar_lea.sflag [#allocation4], 1
    %389 = vsyncpa %s388, 1
    %390 = vsyncpa [#allocation7], 1
    %s391 = scalar_lea.sflag [#allocation7], 1
    %392 = vsyncpa %s391, 1
    %393 = vsyncpa [#allocation5], 1
    %s394 = scalar_lea.sflag [#allocation5], 1
    %395 = vsyncpa %s394, 1

</llo_original>
